<compile_context>
chip_gen: v6e
topology: v6e:2x2x1
jax: 0.10.0
libtpu: 0.0.40
codegen_flags: <defaults>
</compile_context>

<pallas_src>
import functools

import jax
import jax.numpy as jnp
from jax import lax
from jax.experimental import pallas as pl
from jax.experimental.pallas import tpu as pltpu

LANES = 128
SUBLANES = 8


def _cdiv(a, b):
    return (a + b - 1) // b


def _round_down(a, b):
    return (a // b) * b


def _as_2d_stream(a):
    """Zero-copy 2-D view for the big (BCE) stream; prefers lane-dense (R,128)."""
    if a.size % LANES == 0 and (a.size // LANES) >= SUBLANES:
        return a.reshape(-1, LANES)
    if a.ndim >= 2:
        return a.reshape(-1, a.shape[-1])
    return a.reshape(1, -1)


def _as_2d_small(a):
    """Zero-copy 2-D view for the small (KL) arrays (full-array BlockSpec)."""
    if a.size % LANES == 0:
        return a.reshape(-1, LANES)
    if a.ndim >= 2:
        return a.reshape(-1, a.shape[-1])
    return a.reshape(1, -1)


def _loss_kernel(x_ref, p_ref, mu_ref, lv_ref, out_ref, bce_acc, kl_sc,
                 *, steps, tile_rows, valid_rows, needs_mask):
    c = pl.program_id(0)   # TensorCore split ("parallel")
    i = pl.program_id(1)   # streaming step within this core ("arbitrary")

    @pl.when(i == 0)
    def _init():
        bce_acc[...] = jnp.zeros_like(bce_acc)
        kl_sc[0] = 0.0

    # ---- Bernoulli NLL (nn.BCELoss reduction='sum'; PyTorch clamps logs at -100)
    x = x_ref[...].astype(jnp.float32)
    p = p_ref[...].astype(jnp.float32)
    log_p = jnp.maximum(jnp.log(p), -100.0)
    log_1mp = jnp.maximum(jnp.log(1.0 - p), -100.0)
    bce = -(x * log_p + (1.0 - x) * log_1mp)

    if needs_mask:
        # Rows past `valid_rows` are out-of-bounds/duplicated tail data: zero them
        # BEFORE accumulating (mask from the *logical* block index so clamped
        # duplicate blocks contribute nothing).
        logical_block = c * steps + i
        row_ids = logical_block * tile_rows + lax.broadcasted_iota(
            jnp.int32, bce.shape, 0)
        bce = jnp.where(row_ids < valid_rows, bce, 0.0)

    # Fold the (tile_rows, C) block into the (8, C) accumulator with VPU adds
    # only (no per-step cross-lane reduction).
    cols = bce.shape[1]
    bce_acc[...] += jnp.sum(
        bce.reshape(tile_rows // SUBLANES, SUBLANES, cols), axis=0)

    # ---- Gaussian KL: whole (small) latent arrays, computed exactly once.
    @pl.when((c == 0) & (i == 0))
    def _kl():
        mu = mu_ref[...].astype(jnp.float32)
        lv = lv_ref[...].astype(jnp.float32)
        kl_sc[0] = jnp.sum(1.0 + lv - mu * mu - jnp.exp(lv))

    # ---- Per-core finalize: reduce accumulator, write this core's partials.
    @pl.when(i == pl.num_programs(1) - 1)
    def _fin():
        out_ref[0, 0] = (jnp.zeros((SUBLANES, LANES), jnp.float32)
                         + jnp.sum(bce_acc[...]))
        out_ref[0, 1] = (jnp.zeros((SUBLANES, LANES), jnp.float32)
                         + kl_sc[0])


@functools.partial(jax.jit, static_argnames=("block_rows",))
def vae_loss(x, recon_x, mu, logvar, beta=1.0, *, block_rows=2048):
    """Pallas equivalent of Loss.forward (bernoulli likelihood, gauss prior)."""
    d = recon_x.shape[-1]
    x_flat = x.reshape(-1, d)                    # == torch x.view(-1, recon_x.size(-1))
    recon_flat = recon_x.reshape(x_flat.shape)

    # ---- BCE stream: zero-copy 2-D views, ragged tail handled in-kernel. ----
    x2 = _as_2d_stream(x_flat)
    p2 = _as_2d_stream(recon_flat)
    valid_rows = x2.shape[0]
    if x2.shape[0] < SUBLANES:
        # Tiny-input fallback: pad a handful of rows (cheap); padded rows are
        # masked in-kernel, their values never matter.
        pad = SUBLANES - x2.shape[0]
        x2 = jnp.pad(x2, ((0, pad), (0, 0)))
        p2 = jnp.pad(p2, ((0, pad), (0, 0)))
    rows_arr, c_bce = x2.shape

    # Row-tile height (multiple of 8, never larger than the array).
    br = max(SUBLANES, _round_down(int(block_rows), SUBLANES))
    tile_rows = min(br, _round_down(rows_arr, SUBLANES))
    num_blocks = _cdiv(rows_arr, tile_rows)
    steps = _cdiv(num_blocks, 2)                 # per-core step count
    needs_mask = (2 * steps * tile_rows) != valid_rows

    # ---- KL stream: small latents, fetched whole (zero-copy views). ----
    mu2 = _as_2d_small(mu)
    lv2 = _as_2d_small(logvar)

    def bce_map(ci, ii):
        # Clamp so logically-out-of-range blocks re-read a valid block; their
        # contribution is zeroed by the in-kernel row mask.
        return (jnp.minimum(ci * steps + ii, num_blocks - 1), 0)

    kernel = functools.partial(
        _loss_kernel, steps=steps, tile_rows=tile_rows,
        valid_rows=valid_rows, needs_mask=needs_mask)

    # Honest VMEM budget: double-buffered BCE tiles + whole KL arrays + scratch.
    in_item = x2.dtype.itemsize
    kl_item = mu2.dtype.itemsize
    vmem_need = (2 * 2 * tile_rows * c_bce * in_item
                 + 2 * 2 * mu2.size * kl_item
                 + SUBLANES * c_bce * 4
                 + 2 * 2 * SUBLANES * LANES * 4)
    vmem_limit = int(min(max(vmem_need * 3 // 2 + (2 << 20), 4 << 20), 64 << 20))

    n_bce = x_flat.size
    n_kl = mu.size
    cost = pl.CostEstimate(
        flops=6 * n_bce + 6 * n_kl,
        transcendentals=2 * n_bce + n_kl,
        bytes_accessed=int(x2.nbytes + p2.nbytes + mu2.nbytes + lv2.nbytes
                           + 2 * 2 * SUBLANES * LANES * 4),
    )

    partials = pl.pallas_call(
        kernel,
        out_shape=jax.ShapeDtypeStruct((2, 2, SUBLANES, LANES), jnp.float32),
        grid_spec=pltpu.PrefetchScalarGridSpec(
            num_scalar_prefetch=0,
            grid=(2, steps),
            in_specs=[
                pl.BlockSpec((tile_rows, c_bce), bce_map),
                pl.BlockSpec((tile_rows, c_bce), bce_map),
                pl.BlockSpec(mu2.shape, lambda ci, ii: (0, 0)),
                pl.BlockSpec(lv2.shape, lambda ci, ii: (0, 0)),
            ],
            out_specs=pl.BlockSpec((1, 2, SUBLANES, LANES),
                                   lambda ci, ii: (ci, 0, 0, 0)),
            scratch_shapes=[
                pltpu.VMEM((SUBLANES, c_bce), jnp.float32),   # BCE partial sums
                pltpu.SMEM((1,), jnp.float32),                # raw KL sum
            ],
        ),
        compiler_params=pltpu.CompilerParams(
            dimension_semantics=("parallel", "arbitrary"),
            vmem_limit_bytes=vmem_limit,
        ),
        cost_estimate=cost,
    )(x2, p2, mu2, lv2)

    ell = partials[:, 0, 0, 0].sum()
    kld = -0.5 * partials[:, 1, 0, 0].sum()
    loss = ell + beta * kld
    return loss, ell, kld


def _reference(x, recon_x, mu, logvar, beta):
    d = recon_x.shape[-1]
    x_flat = x.reshape(-1, d).astype(jnp.float32)
    p = recon_x.reshape(x_flat.shape).astype(jnp.float32)
    ell = jnp.sum(
        -(x_flat * jnp.maximum(jnp.log(p), -100.0)
          + (1.0 - x_flat) * jnp.maximum(jnp.log(1.0 - p), -100.0)))
    mu32 = mu.astype(jnp.float32)
    lv32 = logvar.astype(jnp.float32)
    kld = -0.5 * jnp.sum(1.0 + lv32 - mu32 * mu32 - jnp.exp(lv32))
    return ell + beta * kld, ell, kld


def _check(got, ref):
    for g, r in zip(got, ref):
        assert jnp.allclose(g, r, rtol=1e-4, atol=1e-3), (g, r)


if __name__ == "__main__":
    # alpha_prior buffer from __init__ (unused in forward); kept for parity.
    sources = 2
    alpha_prior = jnp.ones((1, sources), dtype=jnp.float32)  # noqa: F841

    # --- Test 1: lane-dense zero-copy path, multi-step grid on both cores. ---
    k1, k2, k3, k4 = jax.random.split(jax.random.PRNGKey(0), 4)
    B, T, D, L = 4, 16, 64, 16
    N = B * T
    x = jax.random.uniform(k1, (B, T, D), dtype=jnp.float32)
    recon_x = jax.nn.sigmoid(jax.random.normal(k2, (N, D), dtype=jnp.float32))
    mu = jax.random.normal(k3, (N, L), dtype=jnp.float32)
    logvar = 0.1 * jax.random.normal(k4, (N, L), dtype=jnp.float32)

    out = vae_loss(x, recon_x, mu, logvar, beta=1.0)
    jax.block_until_ready(out)
    _check(out, _reference(x, recon_x, mu, logvar, 1.0))

    out_small_blocks = vae_loss(x, recon_x, mu, logvar, beta=1.0, block_rows=8)
    jax.block_until_ready(out_small_blocks)
    _check(out_small_blocks, _reference(x, recon_x, mu, logvar, 1.0))

    # --- Test 2: non-128-aligned sizes -> natural (N, D) view + tail masking. ---
    k5, k6, k7, k8 = jax.random.split(jax.random.PRNGKey(1), 4)
    B2, T2, D2, L2 = 2, 9, 48, 12
    N2 = B2 * T2
    x_b = jax.random.uniform(k5, (B2, T2, D2), dtype=jnp.float32)
    recon_b = jax.nn.sigmoid(jax.random.normal(k6, (N2, D2), dtype=jnp.float32))
    mu_b = jax.random.normal(k7, (N2, L2), dtype=jnp.float32)
    lv_b = 0.1 * jax.random.normal(k8, (N2, L2), dtype=jnp.float32)

    out2 = vae_loss(x_b, recon_b, mu_b, lv_b, beta=0.5)
    jax.block_until_ready(out2)
    _check(out2, _reference(x_b, recon_b, mu_b, lv_b, 0.5))

    # --- Test 3: tiny input exercising the <8-row fallback + full masking. ---
    k9, k10, k11, k12 = jax.random.split(jax.random.PRNGKey(2), 4)
    x_c = jax.random.uniform(k9, (1, 2, 32), dtype=jnp.float32)
    recon_c = jax.nn.sigmoid(jax.random.normal(k10, (2, 32), dtype=jnp.float32))
    mu_c = jax.random.normal(k11, (2, 4), dtype=jnp.float32)
    lv_c = 0.1 * jax.random.normal(k12, (2, 4), dtype=jnp.float32)

    out3 = vae_loss(x_c, recon_c, mu_c, lv_c, beta=2.0)
    jax.block_until_ready(out3)
    _check(out3, _reference(x_c, recon_c, mu_c, lv_c, 2.0))

    print("KERNEL_OK")
</pallas_src>

<mosaic_0001>
module attributes {stable_mosaic.version = 11 : i64} {
  func.func @_loss_kernel(%arg0: i32, %arg1: i32, %arg2: memref<32x128xf32, #tpu.memory_space<vmem>>, %arg3: memref<32x128xf32, #tpu.memory_space<vmem>>, %arg4: memref<8x128xf32, #tpu.memory_space<vmem>>, %arg5: memref<8x128xf32, #tpu.memory_space<vmem>>, %arg6: memref<1x2x8x128xf32, #tpu.memory_space<vmem>>, %arg7: memref<8x128xf32, #tpu.memory_space<vmem>>, %arg8: memref<1xf32, #tpu.memory_space<smem>>) attributes {dimension_semantics = [#tpu.dimension_semantics<parallel>, #tpu.dimension_semantics<arbitrary>], iteration_bounds = array<i64: 2, 1>, scalar_prefetch = 0 : i64, scratch_operands = 2 : i64, tpu.core_type = #tpu.core_type<tc>, window_params = [{transform_indices = @transform_0, window_bounds = array<i64: 32, 128>}, {transform_indices = @transform_1, window_bounds = array<i64: 32, 128>}, {pipeline_mode = #tpu.pipeline_mode<synchronous>, transform_indices = @transform_2, window_bounds = array<i64: 8, 128>}, {pipeline_mode = #tpu.pipeline_mode<synchronous>, transform_indices = @transform_3, window_bounds = array<i64: 8, 128>}, {transform_indices = @transform_4, window_bounds = array<i64: 1, 2, 8, 128>}]} {
    %c0_i32 = arith.constant 0 : i32
    %0 = arith.cmpi eq, %arg1, %c0_i32 : i32
    %1 = arith.extui %0 : i1 to i32
    %c0_i32_0 = arith.constant 0 : i32
    %2 = arith.cmpi ne, %1, %c0_i32_0 : i32
    scf.if %2 {
      %cst_20 = arith.constant 0.000000e+00 : f32
      %43 = vector.broadcast %cst_20 : f32 to vector<8x128xf32>
      %c0_21 = arith.constant 0 : index
      %c0_22 = arith.constant 0 : index
      %44 = vector.load %arg7[%c0_21, %c0_22] : memref<8x128xf32, #tpu.memory_space<vmem>>, vector<8x128xf32>
      tpu.vector_store %arg7[%c0_21, %c0_22], %43 {strides = array<i32>} : memref<8x128xf32, #tpu.memory_space<vmem>>, vector<8x128xf32>,
      %cst_23 = arith.constant 0.000000e+00 : f32
      %c0_24 = arith.constant 0 : index
      %45 = memref.load %arg8[%c0_24] : memref<1xf32, #tpu.memory_space<smem>>
      memref.store %cst_23, %arg8[%c0_24] : memref<1xf32, #tpu.memory_space<smem>>
    } else {
    }
    %c0 = arith.constant 0 : index
    %c0_1 = arith.constant 0 : index
    %3 = vector.load %arg2[%c0, %c0_1] : memref<32x128xf32, #tpu.memory_space<vmem>>, vector<32x128xf32>
    %c0_2 = arith.constant 0 : index
    %c0_3 = arith.constant 0 : index
    %4 = vector.load %arg3[%c0_2, %c0_3] : memref<32x128xf32, #tpu.memory_space<vmem>>, vector<32x128xf32>
    %5 = math.log %4 : vector<32x128xf32>
    %cst = arith.constant -1.000000e+02 : f32
    %6 = vector.broadcast %cst : f32 to vector<32x128xf32>
    %7 = arith.maximumf %5, %6 : vector<32x128xf32>
    %cst_4 = arith.constant 1.000000e+00 : f32
    %8 = vector.broadcast %cst_4 : f32 to vector<32x128xf32>
    %9 = arith.subf %8, %4 : vector<32x128xf32>
    %10 = math.log %9 : vector<32x128xf32>
    %cst_5 = arith.constant -1.000000e+02 : f32
    %11 = vector.broadcast %cst_5 : f32 to vector<32x128xf32>
    %12 = arith.maximumf %10, %11 : vector<32x128xf32>
    %13 = arith.mulf %3, %7 : vector<32x128xf32>
    %cst_6 = arith.constant 1.000000e+00 : f32
    %14 = vector.broadcast %cst_6 : f32 to vector<32x128xf32>
    %15 = arith.subf %14, %3 : vector<32x128xf32>
    %16 = arith.mulf %15, %12 : vector<32x128xf32>
    %17 = arith.addf %13, %16 : vector<32x128xf32>
    %cst_7 = arith.constant 0.000000e+00 : f32
    %18 = vector.broadcast %cst_7 : f32 to vector<32x128xf32>
    %19 = arith.subf %18, %17 : vector<32x128xf32>
    %c1_i32 = arith.constant 1 : i32
    %20 = arith.muli %arg0, %c1_i32 : i32
    %21 = arith.addi %20, %arg1 : i32
    %c32_i32 = arith.constant 32 : i32
    %22 = arith.muli %21, %c32_i32 : i32
    %23 = tpu.iota {dimensions = array<i32: 0>} : vector<32x128xi32>
    %24 = vector.broadcast %22 : i32 to vector<32x128xi32>
    %25 = arith.addi %24, %23 : vector<32x128xi32>
    %c32_i32_8 = arith.constant 32 : i32
    %26 = vector.broadcast %c32_i32_8 : i32 to vector<32x128xi32>
    %27 = arith.cmpi slt, %25, %26 : vector<32x128xi32>
    %cst_9 = arith.constant 0.000000e+00 : f32
    %28 = vector.broadcast %cst_9 : f32 to vector<32x128xf32>
    %29 = arith.select %27, %19, %28 : vector<32x128xi1>, vector<32x128xf32>
    %c0_10 = arith.constant 0 : index
    %c0_11 = arith.constant 0 : index
    %30 = vector.load %arg7[%c0_10, %c0_11] : memref<8x128xf32, #tpu.memory_space<vmem>>, vector<8x128xf32>
    %31 = vector.shape_cast %29 : vector<32x128xf32> to vector<4x8x128xf32>
    %cst_12 = arith.constant dense<0.000000e+00> : vector<8x128xf32>
    %32 = vector.multi_reduction <add>, %31, %cst_12 [0] : vector<4x8x128xf32> to vector<8x128xf32>
    %33 = arith.addf %30, %32 : vector<8x128xf32>
    %c0_13 = arith.constant 0 : index
    %c0_14 = arith.constant 0 : index
    %34 = vector.load %arg7[%c0_13, %c0_14] : memref<8x128xf32, #tpu.memory_space<vmem>>, vector<8x128xf32>
    tpu.vector_store %arg7[%c0_13, %c0_14], %33 {strides = array<i32>} : memref<8x128xf32, #tpu.memory_space<vmem>>, vector<8x128xf32>,
    %c0_i32_15 = arith.constant 0 : i32
    %35 = arith.cmpi eq, %arg0, %c0_i32_15 : i32
    %c0_i32_16 = arith.constant 0 : i32
    %36 = arith.cmpi eq, %arg1, %c0_i32_16 : i32
    %37 = arith.andi %35, %36 : i1
    %38 = arith.extui %37 : i1 to i32
    %c0_i32_17 = arith.constant 0 : i32
    %39 = arith.cmpi ne, %38, %c0_i32_17 : i32
    scf.if %39 {
      %c0_20 = arith.constant 0 : index
      %c0_21 = arith.constant 0 : index
      %43 = vector.load %arg4[%c0_20, %c0_21] : memref<8x128xf32, #tpu.memory_space<vmem>>, vector<8x128xf32>
      %c0_22 = arith.constant 0 : index
      %c0_23 = arith.constant 0 : index
      %44 = vector.load %arg5[%c0_22, %c0_23] : memref<8x128xf32, #tpu.memory_space<vmem>>, vector<8x128xf32>
      %cst_24 = arith.constant 1.000000e+00 : f32
      %45 = vector.broadcast %cst_24 : f32 to vector<8x128xf32>
      %46 = arith.addf %45, %44 : vector<8x128xf32>
      %47 = arith.mulf %43, %43 : vector<8x128xf32>
      %48 = arith.subf %46, %47 : vector<8x128xf32>
      %49 = math.exp %44 : vector<8x128xf32>
      %50 = arith.subf %48, %49 : vector<8x128xf32>
      %51 = vector.shape_cast %50 : vector<8x128xf32> to vector<1x8x128xf32>
      %cst_25 = arith.constant dense<0.000000e+00> : vector<1xf32>
      %52 = vector.multi_reduction <add>, %51, %cst_25 [1, 2] : vector<1x8x128xf32> to vector<1xf32>
      %53 = vector.shape_cast %52 : vector<1xf32> to vector<1x1x1xf32>
      %54 = vector.extract %53[0, 0, 0] : f32 from vector<1x1x1xf32>
      %c0_26 = arith.constant 0 : index
      %55 = memref.load %arg8[%c0_26] : memref<1xf32, #tpu.memory_space<smem>>
      memref.store %54, %arg8[%c0_26] : memref<1xf32, #tpu.memory_space<smem>>
    } else {
    }
    %c0_i32_18 = arith.constant 0 : i32
    %40 = arith.cmpi eq, %arg1, %c0_i32_18 : i32
    %41 = arith.extui %40 : i1 to i32
    %c0_i32_19 = arith.constant 0 : i32
    %42 = arith.cmpi ne, %41, %c0_i32_19 : i32
    scf.if %42 {
      %cst_20 = arith.constant 0.000000e+00 : f32
      %43 = vector.broadcast %cst_20 : f32 to vector<8x128xf32>
      %c0_21 = arith.constant 0 : index
      %c0_22 = arith.constant 0 : index
      %44 = vector.load %arg7[%c0_21, %c0_22] : memref<8x128xf32, #tpu.memory_space<vmem>>, vector<8x128xf32>
      %45 = vector.shape_cast %44 : vector<8x128xf32> to vector<1x8x128xf32>
      %cst_23 = arith.constant dense<0.000000e+00> : vector<1xf32>
      %46 = vector.multi_reduction <add>, %45, %cst_23 [1, 2] : vector<1x8x128xf32> to vector<1xf32>
      %47 = vector.shape_cast %46 : vector<1xf32> to vector<1x1x1xf32>
      %48 = vector.extract %47[0, 0, 0] : f32 from vector<1x1x1xf32>
      %49 = vector.broadcast %48 : f32 to vector<8x128xf32>
      %50 = arith.addf %43, %49 : vector<8x128xf32>
      %c0_24 = arith.constant 0 : index
      %c0_25 = arith.constant 0 : index
      %c0_26 = arith.constant 0 : index
      %c0_27 = arith.constant 0 : index
      %51 = vector.load %arg6[%c0_24, %c0_25, %c0_26, %c0_27] : memref<1x2x8x128xf32, #tpu.memory_space<vmem>>, vector<1x1x8x128xf32>
      %52 = vector.shape_cast %51 : vector<1x1x8x128xf32> to vector<8x128xf32>
      %53 = vector.shape_cast %50 : vector<8x128xf32> to vector<1x1x8x128xf32>
      tpu.vector_store %arg6[%c0_24, %c0_25, %c0_26, %c0_27], %53 {strides = array<i32>} : memref<1x2x8x128xf32, #tpu.memory_space<vmem>>, vector<1x1x8x128xf32>,
      %cst_28 = arith.constant 0.000000e+00 : f32
      %54 = vector.broadcast %cst_28 : f32 to vector<8x128xf32>
      %c0_29 = arith.constant 0 : index
      %55 = memref.load %arg8[%c0_29] : memref<1xf32, #tpu.memory_space<smem>>
      %56 = vector.broadcast %55 : f32 to vector<8x128xf32>
      %57 = arith.addf %54, %56 : vector<8x128xf32>
      %c0_30 = arith.constant 0 : index
      %c1 = arith.constant 1 : index
      %c0_31 = arith.constant 0 : index
      %c0_32 = arith.constant 0 : index
      %58 = vector.load %arg6[%c0_30, %c1, %c0_31, %c0_32] : memref<1x2x8x128xf32, #tpu.memory_space<vmem>>, vector<1x1x8x128xf32>
      %59 = vector.shape_cast %58 : vector<1x1x8x128xf32> to vector<8x128xf32>
      %60 = vector.shape_cast %57 : vector<8x128xf32> to vector<1x1x8x128xf32>
      tpu.vector_store %arg6[%c0_30, %c1, %c0_31, %c0_32], %60 {strides = array<i32>} : memref<1x2x8x128xf32, #tpu.memory_space<vmem>>, vector<1x1x8x128xf32>,
    } else {
    }
    return
  }
  func.func @transform_0(%arg0: i32, %arg1: i32) -> (i32, i32) {
    %c1_i32 = arith.constant 1 : i32
    %0 = arith.muli %arg0, %c1_i32 : i32
    %1 = arith.addi %0, %arg1 : i32
    %c0_i32 = arith.constant 0 : i32
    %2 = arith.minsi %1, %c0_i32 : i32
    %c0_i32_0 = arith.constant 0 : i32
    %c0_i32_1 = arith.constant 0 : i32
    return %2, %c0_i32_0 : i32, i32
  }
  func.func @transform_1(%arg0: i32, %arg1: i32) -> (i32, i32) {
    %c1_i32 = arith.constant 1 : i32
    %0 = arith.muli %arg0, %c1_i32 : i32
    %1 = arith.addi %0, %arg1 : i32
    %c0_i32 = arith.constant 0 : i32
    %2 = arith.minsi %1, %c0_i32 : i32
    %c0_i32_0 = arith.constant 0 : i32
    %c0_i32_1 = arith.constant 0 : i32
    return %2, %c0_i32_0 : i32, i32
  }
  func.func @transform_2(%arg0: i32, %arg1: i32) -> (i32, i32) {
    %c0_i32 = arith.constant 0 : i32
    %c0_i32_0 = arith.constant 0 : i32
    %c0_i32_1 = arith.constant 0 : i32
    return %c0_i32, %c0_i32_0 : i32, i32
  }
  func.func @transform_3(%arg0: i32, %arg1: i32) -> (i32, i32) {
    %c0_i32 = arith.constant 0 : i32
    %c0_i32_0 = arith.constant 0 : i32
    %c0_i32_1 = arith.constant 0 : i32
    return %c0_i32, %c0_i32_0 : i32, i32
  }
  func.func @transform_4(%arg0: i32, %arg1: i32) -> (i32, i32, i32, i32) {
    %c0_i32 = arith.constant 0 : i32
    %c0_i32_0 = arith.constant 0 : i32
    %c0_i32_1 = arith.constant 0 : i32
    %c0_i32_2 = arith.constant 0 : i32
    return %arg0, %c0_i32, %c0_i32_0, %c0_i32_1 : i32, i32, i32, i32
  }
}

</mosaic_0001>

<llo_original>
// kernel: vae_loss.1
$region0: #{vae_loss.1}
  #allocation0 [shape = 'u32[]', space=smem, size = 0x4, offset = 0x4, fixed_abs, tag = 'smem constant byte address 0x4 - core index']
  #allocation1 [shape = 'u32[144,128]{1,0:T(1,128)}', space=vmem, size = 0x12000, scoped, tag = 'internal scratch']
  #allocation2 [shape = 'f32[8,128]{1,0:T(8,128)}', space=vmem, size = 0x1000, scoped, tag = 'scratch operand']
  #allocation3 [shape = 'f32[1]{0:T(128)}', space=smem, size = 0x200, scoped, tag = 'scratch operand']
  %s0 = inlined_call_operand.vmem [shape: f32[32,128], index: 0, kind: input, shape index: {}]
  %s1 = inlined_call_operand.vmem [shape: f32[32,128], index: 1, kind: input, shape index: {}]
  %s2 = inlined_call_operand.vmem [shape: f32[8,128], index: 2, kind: input, shape index: {}]
  %s3 = inlined_call_operand.vmem [shape: f32[8,128], index: 3, kind: input, shape index: {}]
  %s4 = inlined_call_operand.vmem [shape: f32[2,2,8,128], index: 4, kind: output, shape index: {}]
  %s5 = sld [smem:[#allocation0]]
  $region61: #{vae_loss.1} parent=0
    _
  %s7 = ssub.s32 1, %s5
  %s8 = scalar_select 0, %s7, %s5
  loop: start=0, step=1, limit=4
  $region2: #{vae_loss.1} parent=0 // loop_pre_header
    _
  $region3: #{vae_loss.1} parent=0 // loop_header
    %s10 = sphi 0, %s14
    %p11 = scmp.ge.s32.totalorder %s10, 4
    %s17 = sphi 0, %s29
    %s18 = sphi 0, %s25
    %s19 = sphi 0, %s17
    %s20 = sphi 0, %s18
    %s21 = sphi 0, %s19
    %s22 = sphi 0, %s20
    %s38 = sphi 0, %s40
    %s41 = sphi 0, %s38
    %s42 = sphi 0, %s41
    %s58 = sphi 0, %s42
    %s70 = sphi 0, %s72
    %s73 = sphi 0, %s70
    %s74 = sphi 0, %s73
    %s90 = sphi 0, %s74
    %s94 = sphi 0, %s94
    %s96 = sphi 0, %s94
    %s97 = sphi 0, %s96
    %s111 = sphi 0, %s97
    %s115 = sphi 0, %s115
    %s117 = sphi 0, %s115
    %s118 = sphi 0, %s117
    %s132 = sphi 0, %s118
    %s138 = sphi 0, %s140
    %s141 = sphi 0, %s138
    %s142 = sphi 0, %s141
    %s158 = sphi 0, %s142
  $region4: #{vae_loss.1} parent=0 // loop_header_branch
    %13 = sbr.rel (%p11) target = $region8
  $region5: #{vae_loss.1} parent=0 // loop_body
    %s15 = ssub.s32 %s10, 1
    %s16 = ssub.s32 %s10, 2
    %s23 = sadd.s32 1, %s18
    %p24 = scmp.ge.s32.totalorder %s23, 1
    %s25 = scalar_select %p24, 0, %s23
    %s26 = sadd.s32 1, %s17
    %s27 = scalar_select %p24, %s26, %s17
    %p28 = scmp.ge.s32.totalorder %s27, 2
    %s29 = scalar_select %p28, 0, %s27
    %s30 = sadd.s32 %s17, %s18
    %p31 = scmp.lt.s32.totalorder %s30, 0
    %s32 = scalar_select %p31, %s30, 0
    %s33 = sadd.s32 %s29, %s25
    %p34 = scmp.lt.s32.totalorder %s33, 0
    %s35 = scalar_select %p34, %s33, 0
    %s36 = ssub.s32 %s32, %s35
    %p37 = scmp.eq.s32.totalorder %s36, 0
    %s39 = sadd.s32 %s38, 1
    %s40 = scalar_select %p37, %s38, %s39
    %p43 = pneg %p37
    %p44 = scmp.eq.s32.totalorder %s10, 1
    %p45 = por %p43, %p44
    %p46 = scmp.ne.s32.totalorder %s38, %s41
    %p47 = scmp.eq.s32.totalorder %s10, 0
    %p48 = por %p46, %p47
    %p49 = scmp.ne.s32.totalorder %s38, %s41
    %p50 = scmp.eq.s32.totalorder %s15, 1
    %p51 = por %p49, %p50
    %p52 = scmp.ne.s32.totalorder %s41, %s42
    %p53 = scmp.eq.s32.totalorder %s15, 0
    %p54 = por %p52, %p53
    %p55 = scmp.ne.s32.totalorder %s41, %s42
    %p56 = scmp.eq.s32.totalorder %s16, 1
    %p57 = por %p55, %p56
    %p59 = scmp.ne.s32.totalorder %s42, %s58
    %p60 = scmp.eq.s32.totalorder %s16, 0
    %p61 = por %p59, %p60
    %s62 = sadd.s32 %s17, %s18
    %p63 = scmp.lt.s32.totalorder %s62, 0
    %s64 = scalar_select %p63, %s62, 0
    %s65 = sadd.s32 %s29, %s25
    %p66 = scmp.lt.s32.totalorder %s65, 0
    %s67 = scalar_select %p66, %s65, 0
    %s68 = ssub.s32 %s64, %s67
    %p69 = scmp.eq.s32.totalorder %s68, 0
    %s71 = sadd.s32 %s70, 1
    %s72 = scalar_select %p69, %s70, %s71
    %p75 = pneg %p69
    %p76 = scmp.eq.s32.totalorder %s10, 1
    %p77 = por %p75, %p76
    %p78 = scmp.ne.s32.totalorder %s70, %s73
    %p79 = scmp.eq.s32.totalorder %s10, 0
    %p80 = por %p78, %p79
    %p81 = scmp.ne.s32.totalorder %s70, %s73
    %p82 = scmp.eq.s32.totalorder %s15, 1
    %p83 = por %p81, %p82
    %p84 = scmp.ne.s32.totalorder %s73, %s74
    %p85 = scmp.eq.s32.totalorder %s15, 0
    %p86 = por %p84, %p85
    %p87 = scmp.ne.s32.totalorder %s73, %s74
    %p88 = scmp.eq.s32.totalorder %s16, 1
    %p89 = por %p87, %p88
    %p91 = scmp.ne.s32.totalorder %s74, %s90
    %p92 = scmp.eq.s32.totalorder %s16, 0
    %p93 = por %p91, %p92
    %s95 = sadd.s32 %s94, 1
    %p98 = scmp.eq.s32.totalorder %s10, 1
    %p99 = scmp.ne.s32.totalorder %s94, %s96
    %p100 = scmp.eq.s32.totalorder %s10, 0
    %p101 = por %p99, %p100
    %p102 = scmp.ne.s32.totalorder %s94, %s96
    %p103 = scmp.eq.s32.totalorder %s15, 1
    %p104 = por %p102, %p103
    %p105 = scmp.ne.s32.totalorder %s96, %s97
    %p106 = scmp.eq.s32.totalorder %s15, 0
    %p107 = por %p105, %p106
    %p108 = scmp.ne.s32.totalorder %s96, %s97
    %p109 = scmp.eq.s32.totalorder %s16, 1
    %p110 = por %p108, %p109
    %p112 = scmp.ne.s32.totalorder %s97, %s111
    %p113 = scmp.eq.s32.totalorder %s16, 0
    %p114 = por %p112, %p113
    %s116 = sadd.s32 %s115, 1
    %p119 = scmp.eq.s32.totalorder %s10, 1
    %p120 = scmp.ne.s32.totalorder %s115, %s117
    %p121 = scmp.eq.s32.totalorder %s10, 0
    %p122 = por %p120, %p121
    %p123 = scmp.ne.s32.totalorder %s115, %s117
    %p124 = scmp.eq.s32.totalorder %s15, 1
    %p125 = por %p123, %p124
    %p126 = scmp.ne.s32.totalorder %s117, %s118
    %p127 = scmp.eq.s32.totalorder %s15, 0
    %p128 = por %p126, %p127
    %p129 = scmp.ne.s32.totalorder %s117, %s118
    %p130 = scmp.eq.s32.totalorder %s16, 1
    %p131 = por %p129, %p130
    %p133 = scmp.ne.s32.totalorder %s118, %s132
    %p134 = scmp.eq.s32.totalorder %s16, 0
    %p135 = por %p133, %p134
    %s136 = ssub.s32 %s17, %s29
    %p137 = scmp.eq.s32.totalorder %s136, 0
    %s139 = sadd.s32 %s138, 1
    %s140 = scalar_select %p137, %s138, %s139
    %p143 = pneg %p137
    %p144 = scmp.eq.s32.totalorder %s10, 1
    %p145 = por %p143, %p144
    %p146 = scmp.ne.s32.totalorder %s138, %s141
    %p147 = scmp.eq.s32.totalorder %s10, 0
    %p148 = por %p146, %p147
    %p149 = scmp.ne.s32.totalorder %s138, %s141
    %p150 = scmp.eq.s32.totalorder %s15, 1
    %p151 = por %p149, %p150
    %p152 = scmp.ne.s32.totalorder %s141, %s142
    %p153 = scmp.eq.s32.totalorder %s15, 0
    %p154 = por %p152, %p153
    %p155 = scmp.ne.s32.totalorder %s141, %s142
    %p156 = scmp.eq.s32.totalorder %s16, 1
    %p157 = por %p155, %p156
    %p159 = scmp.ne.s32.totalorder %s142, %s158
    %p160 = scmp.eq.s32.totalorder %s16, 0
    %p161 = por %p159, %p160
    %p162 = scmp.le.s32.totalorder 1, %s10
    %p163 = scmp.lt.s32.totalorder %s10, 3
    %p164 = pnand %p162, %p163
    %p165 = pneg %p164
    // Predicated region
    $region9: #{vae_loss.1} parent=5 // pred_check
      _
    $region10: #{vae_loss.1} parent=5 // pred_check_branch
      %167 = sbr.rel (%p164) target = $region12
    $region11: #{vae_loss.1} parent=5 // pred_region
      %s168 = ssub.s32 %s10, 1
      // Predicated region
      $region13: #{vae_loss.1} parent=11 // pred_check
        %p169 = pneg %p107
      $region14: #{vae_loss.1} parent=11 // pred_check_branch
        %171 = sbr.rel (%p169) target = $region16
      $region15: #{vae_loss.1} parent=11 // pred_region
        _
      $region16: #{vae_loss.1} parent=11 // pred_fallthru
        _
      // Predicated region
      $region17: #{vae_loss.1} parent=11 // pred_check
        %p172 = pneg %p128
      $region18: #{vae_loss.1} parent=11 // pred_check_branch
        %174 = sbr.rel (%p172) target = $region20
      $region19: #{vae_loss.1} parent=11 // pred_region
        _
      $region20: #{vae_loss.1} parent=11 // pred_fallthru
        _
    $region12: #{vae_loss.1} parent=5 // pred_fallthru
      _
    %p175 = scmp.lt.s32.totalorder %s10, 2
    // Predicated region
    $region21: #{vae_loss.1} parent=5 // pred_check
      %p176 = pneg %p175
    $region22: #{vae_loss.1} parent=5 // pred_check_branch
      %178 = sbr.rel (%p176) target = $region24
    $region23: #{vae_loss.1} parent=5 // pred_region
      // Predicated region
      $region25: #{vae_loss.1} parent=23 // pred_check
        %p179 = pneg %p48
      $region26: #{vae_loss.1} parent=23 // pred_check_branch
        %181 = sbr.rel (%p179) target = $region28
      $region27: #{vae_loss.1} parent=23 // pred_region
        %s182 = sadd.s32 %s17, %s18
        %p183 = scmp.lt.s32.totalorder %s182, 0
        %s184 = scalar_select %p183, %s182, 0
        %s185 = smul.u32 4, %s184
        %p186 = scmp.lt.s32.totalorder %s185, 3
        %s187 = scalar_select %p186, %s185, 3
        %s188 = smul.addr %s187, 8
        %s189 = scalar_lea.vmem %s0, %s188
        %s190 = sadd.s32 %s17, %s18
        %p191 = scmp.lt.s32.totalorder %s190, 0
        %s192 = scalar_select %p191, %s190, 0
        %s193 = smul.u32 4, %s192
      $region28: #{vae_loss.1} parent=23 // pred_fallthru
        _
      // Predicated region
      $region29: #{vae_loss.1} parent=23 // pred_check
        %p194 = pneg %p80
      $region30: #{vae_loss.1} parent=23 // pred_check_branch
        %196 = sbr.rel (%p194) target = $region32
      $region31: #{vae_loss.1} parent=23 // pred_region
        %s197 = sadd.s32 %s17, %s18
        %p198 = scmp.lt.s32.totalorder %s197, 0
        %s199 = scalar_select %p198, %s197, 0
        %s200 = smul.u32 4, %s199
        %p201 = scmp.lt.s32.totalorder %s200, 3
        %s202 = scalar_select %p201, %s200, 3
        %s203 = smul.addr %s202, 8
        %s204 = scalar_lea.vmem %s1, %s203
        %s205 = sadd.s32 %s17, %s18
        %p206 = scmp.lt.s32.totalorder %s205, 0
        %s207 = scalar_select %p206, %s205, 0
        %s208 = smul.u32 4, %s207
      $region32: #{vae_loss.1} parent=23 // pred_fallthru
        _
    $region24: #{vae_loss.1} parent=5 // pred_fallthru
      _
    %p209 = scmp.le.s32.totalorder 1, %s10
    %p210 = scmp.lt.s32.totalorder %s10, 3
    %p211 = pnand %p209, %p210
    %p212 = pneg %p211
    // Predicated region
    $region33: #{vae_loss.1} parent=5 // pred_check
      _
    $region34: #{vae_loss.1} parent=5 // pred_check_branch
      %214 = sbr.rel (%p211) target = $region36
    $region35: #{vae_loss.1} parent=5 // pred_region
      %s215 = ssub.s32 %s10, 1
      %s216 = sadd.s32 %s19, %s20
      %p217 = scmp.lt.s32.totalorder %s216, 0
      %s218 = scalar_select %p217, %s216, 0
      %s219 = smul.u32 4, %s218
      %p220 = scmp.lt.s32.totalorder %s219, 3
      %s221 = scalar_select %p220, %s219, 3
      %s222 = smul.addr %s221, 8
      %s223 = scalar_lea.vmem %s0, %s222
      %p224 = pneg %p54
      %p225 = pneg %p51
      %s226 = sadd.s32 %s19, %s20
      %p227 = scmp.lt.s32.totalorder %s226, 0
      %s228 = scalar_select %p227, %s226, 0
      %s229 = smul.u32 4, %s228
      %p230 = scmp.lt.s32.totalorder %s229, 3
      %s231 = scalar_select %p230, %s229, 3
      %s232 = smul.addr %s231, 8
      %s233 = scalar_lea.vmem %s1, %s232
      %p234 = pneg %p86
      %p235 = pneg %p83
      %p236 = pneg %p107
      %p237 = pneg %p104
      %p238 = pneg %p128
      %p239 = pneg %p125
      %p240 = pneg %p154
      %p241 = pneg %p151
      %p242 = scmp.lt.s32.totalorder %s19, 1
      %s243 = scalar_select %p242, %s19, 1
      %s244 = smul.addr %s243, 2
      %s245 = smul.addr %s244, 8
      %s246 = scalar_lea.vmem %s4, %s245
      %s247 = sadd.s32 %s19, %s20
      %p248 = scmp.lt.s32.totalorder %s247, 0
      %s249 = scalar_select %p248, %s247, 0
      %s250 = smul.u32 4, %s249
      %p251 = scmp.lt.s32.totalorder %s250, 3
      %s252 = scalar_select %p251, %s250, 3
      %s253 = smul.addr %s252, 8
      %s254 = scalar_lea.vmem %s0, %s253
      %s255 = sadd.s32 %s19, %s20
      %p256 = scmp.lt.s32.totalorder %s255, 0
      %s257 = scalar_select %p256, %s255, 0
      %s258 = smul.u32 4, %s257
      %s259 = sadd.s32 %s19, %s20
      %p260 = scmp.lt.s32.totalorder %s259, 0
      %s261 = scalar_select %p260, %s259, 0
      %s262 = smul.u32 4, %s261
      %p263 = scmp.lt.s32.totalorder %s262, 3
      %s264 = scalar_select %p263, %s262, 3
      %s265 = smul.addr %s264, 8
      %s266 = scalar_lea.vmem %s1, %s265
      %s267 = sadd.s32 %s19, %s20
      %p268 = scmp.lt.s32.totalorder %s267, 0
      %s269 = scalar_select %p268, %s267, 0
      %s270 = smul.u32 4, %s269
      %p271 = scmp.lt.s32.totalorder %s19, 1
      %s272 = scalar_select %p271, %s19, 1
      %s273 = smul.addr %s272, 2
      %s274 = smul.addr %s273, 8
      %s275 = scalar_lea.vmem %s4, %s274
      %p276 = scmp.eq.s32.totalorder %s20, 0
      // Predicated region
      $region37: #{vae_loss.1} parent=35 // pred_check
        %p277 = pneg %p276
      $region38: #{vae_loss.1} parent=35 // pred_check_branch
        %279 = sbr.rel (%p277) target = $region40
      $region39: #{vae_loss.1} parent=35 // pred_region
        %280 = vst [vmem:[#allocation2] sm:$0xff] 0.0
        %s281 = scalar_lea.smem [#allocation3], 0
        %282 = sst [smem:[%s281]] 0.0
      $region40: #{vae_loss.1} parent=35 // pred_fallthru
        _
      %v283 = vld [vmem:[%s254] sm:$0xff]
      %v284 = vld [vmem:[%s254 + $0x8] sm:$0xff]
      %v285 = vld [vmem:[%s254 + $0x10] sm:$0xff]
      %v286 = vld [vmem:[%s254 + $0x18] sm:$0xff]
      %v287 = vld [vmem:[%s266] sm:$0xff]
      %v288 = vld [vmem:[%s266 + $0x8] sm:$0xff]
      %v289 = vld [vmem:[%s266 + $0x10] sm:$0xff]
      %v290 = vld [vmem:[%s266 + $0x18] sm:$0xff]
      %v291 = vlog2.pop %v287
      %v292 = vmul.f32 %v291, 0.6931472
      %v293 = vlog2.pop %v288
      %v294 = vmul.f32 %v293, 0.6931472
      %v295 = vlog2.pop %v289
      %v296 = vmul.f32 %v295, 0.6931472
      %v297 = vlog2.pop %v290
      %v298 = vmul.f32 %v297, 0.6931472
      %v299 = vmax.f32 %v292, -100.0
      %v300 = vmax.f32 %v294, -100.0
      %v301 = vmax.f32 %v296, -100.0
      %v302 = vmax.f32 %v298, -100.0
      %v303 = vsub.f32 1.0, %v287
      %v304 = vsub.f32 1.0, %v288
      %v305 = vsub.f32 1.0, %v289
      %v306 = vsub.f32 1.0, %v290
      %v307 = vlog2.pop %v303
      %v308 = vmul.f32 %v307, 0.6931472
      %v309 = vlog2.pop %v304
      %v310 = vmul.f32 %v309, 0.6931472
      %v311 = vlog2.pop %v305
      %v312 = vmul.f32 %v311, 0.6931472
      %v313 = vlog2.pop %v306
      %v314 = vmul.f32 %v313, 0.6931472
      %v315 = vmax.f32 %v308, -100.0
      %v316 = vmax.f32 %v310, -100.0
      %v317 = vmax.f32 %v312, -100.0
      %v318 = vmax.f32 %v314, -100.0
      %v319 = vmul.f32 %v283, %v299
      %v320 = vmul.f32 %v284, %v300
      %v321 = vmul.f32 %v285, %v301
      %v322 = vmul.f32 %v286, %v302
      %v323 = vsub.f32 1.0, %v283
      %v324 = vsub.f32 1.0, %v284
      %v325 = vsub.f32 1.0, %v285
      %v326 = vsub.f32 1.0, %v286
      %v327 = vmul.f32 %v323, %v315
      %v328 = vmul.f32 %v324, %v316
      %v329 = vmul.f32 %v325, %v317
      %v330 = vmul.f32 %v326, %v318
      %v331 = vadd.f32 %v319, %v327
      %v332 = vadd.f32 %v320, %v328
      %v333 = vadd.f32 %v321, %v329
      %v334 = vadd.f32 %v322, %v330
      %v335 = vsub.f32 0.0, %v331
      %v336 = vsub.f32 0.0, %v332
      %v337 = vsub.f32 0.0, %v333
      %v338 = vsub.f32 0.0, %v334
      %s339 = sadd.s32 %s19, %s20
      %s340 = smul.u32 %s339, 32
      %v341 = vlaneseq
      %v342 = vshrl.u32 %v341, 7
      %v343 = vadd.s32 %v342, 8
      %v344 = vadd.s32 %v342, 16
      %v345 = vadd.s32 %v342, 24
      %v346 = vstv %s340
      %v347 = vadd.s32 %v346, %v342
      %v348 = vadd.s32 %v346, %v343
      %v349 = vadd.s32 %v346, %v344
      %v350 = vadd.s32 %v346, %v345
      %vm351 = vcmp.lt.s32.totalorder %v347, 32
      %vm352 = vcmp.lt.s32.totalorder %v348, 32
      %vm353 = vcmp.lt.s32.totalorder %v349, 32
      %vm354 = vcmp.lt.s32.totalorder %v350, 32
      %v355 = vsel %vm351, %v335, 0.0
      %v356 = vsel %vm352, %v336, 0.0
      %v357 = vsel %vm353, %v337, 0.0
      %v358 = vsel %vm354, %v338, 0.0
      %v359 = vld [vmem:[#allocation2] sm:$0xff]
      %v360 = vadd.f32 %v355, %v356
      %v361 = vadd.f32 %v360, %v357
      %v362 = vadd.f32 %v361, %v358
      %v363 = vadd.f32 %v359, %v362
      %364 = vst [vmem:[#allocation2] sm:$0xff] %v363
      %p365 = scmp.eq.s32.totalorder %s19, 0
      %p366 = pnand %p365, %p276
      %p367 = pneg %p366
      // Predicated region
      $region41: #{vae_loss.1} parent=35 // pred_check
        _
      $region42: #{vae_loss.1} parent=35 // pred_check_branch
        %369 = sbr.rel (%p366) target = $region44
      $region43: #{vae_loss.1} parent=35 // pred_region
        %v370 = vld [vmem:[%s2] sm:$0xff]
        %v371 = vld [vmem:[%s3] sm:$0xff]
        %v372 = vadd.f32 %v371, 1.0
        %v373 = vmul.f32 %v370, %v370
        %v374 = vsub.f32 %v372, %v373
        %v375 = vmul.f32 %v371, 1.442695
        %v376 = vpow.pop %v375
        %v377 = vsub.f32 %v374, %v376
        %378 = vadd.xlane.f32.xlu0 %v377
        %v379 = vpop.xlane.xlu0 %378
        %v380 = vrot.slane %v379, 4
        %v381 = vadd.f32 %v379, %v380
        %v382 = vrot.slane %v381, 2
        %v383 = vadd.f32 %v381, %v382
        %v384 = vrot.slane %v383, 1
        %v385 = vadd.f32 %v383, %v384
        %s386 = vtos %v385
        %s387 = scalar_lea.smem [#allocation3], 0
        %388 = sst [smem:[%s387]] %s386
      $region44: #{vae_loss.1} parent=35 // pred_fallthru
        _
      // Predicated region
      $region45: #{vae_loss.1} parent=35 // pred_check
        %p389 = pneg %p276
      $region46: #{vae_loss.1} parent=35 // pred_check_branch
        %391 = sbr.rel (%p389) target = $region48
      $region47: #{vae_loss.1} parent=35 // pred_region
        %v392 = vld [vmem:[#allocation2] sm:$0xff]
        %393 = vadd.xlane.f32.xlu0 %v392
        %v394 = vpop.xlane.xlu0 %393
        %v395 = vrot.slane %v394, 4
        %v396 = vadd.f32 %v394, %v395
        %v397 = vrot.slane %v396, 2
        %v398 = vadd.f32 %v396, %v397
        %v399 = vrot.slane %v398, 1
        %v400 = vadd.f32 %v398, %v399
        %s401 = vtos %v400
        %v402 = vstv %s401
        %v403 = vadd.f32 %v402, 0.0
        %404 = vst [vmem:[%s275] sm:$0xff] %v403
        %s405 = sld [smem:[#allocation3]]
        %v406 = vstv %s405
        %v407 = vadd.f32 %v406, 0.0
        %s408 = scalar_lea.vmem %s275, 8
        %409 = vst [vmem:[%s408] sm:$0xff] %v407
      $region48: #{vae_loss.1} parent=35 // pred_fallthru
        _
      %p410 = scmp.lt.s32.totalorder %s19, 1
      %s411 = scalar_select %p410, %s19, 1
      %s412 = smul.addr %s411, 2
      %s413 = smul.addr %s412, 8
      %s414 = scalar_lea.vmem %s4, %s413
      // Predicated region
      $region49: #{vae_loss.1} parent=35 // pred_check
        %p415 = pneg %p151
      $region50: #{vae_loss.1} parent=35 // pred_check_branch
        %417 = sbr.rel (%p415) target = $region52
      $region51: #{vae_loss.1} parent=35 // pred_region
        _
      $region52: #{vae_loss.1} parent=35 // pred_fallthru
        _
    $region36: #{vae_loss.1} parent=5 // pred_fallthru
      _
    %p418 = scmp.le.s32.totalorder 2, %s10
    // Predicated region
    $region53: #{vae_loss.1} parent=5 // pred_check
      %p419 = pneg %p418
    $region54: #{vae_loss.1} parent=5 // pred_check_branch
      %421 = sbr.rel (%p419) target = $region56
    $region55: #{vae_loss.1} parent=5 // pred_region
      %s422 = ssub.s32 %s10, 2
      // Predicated region
      $region57: #{vae_loss.1} parent=55 // pred_check
        %p423 = pneg %p157
      $region58: #{vae_loss.1} parent=55 // pred_check_branch
        %425 = sbr.rel (%p423) target = $region60
      $region59: #{vae_loss.1} parent=55 // pred_region
        %p426 = scmp.lt.s32.totalorder %s21, 1
        %s427 = scalar_select %p426, %s21, 1
        %s428 = smul.addr %s427, 2
        %s429 = smul.addr %s428, 8
        %s430 = scalar_lea.vmem %s4, %s429
      $region60: #{vae_loss.1} parent=55 // pred_fallthru
        _
    $region56: #{vae_loss.1} parent=5 // pred_fallthru
      _
  $region6: #{vae_loss.1} parent=0 // loop_footer
    %s14 = sadd.s32 1, %s10
  $region7: #{vae_loss.1} parent=0 // loop_footer_branch
    %9 = sbr.rel target = $region3
  $region8: #{vae_loss.1} parent=0 // loop_exit
    _

</llo_original>
